<compile_context>
chip_gen: v6e
topology: v6e:2x2x1
jax: 0.10.0
libtpu: 0.0.40
codegen_flags: <defaults>
</compile_context>

<pallas_src>
from functools import partial

import jax
import jax.numpy as jnp
from jax.experimental import pallas as pl
from jax.experimental.pallas import tpu as pltpu

_LANES = 128
_SUBLANES = 8


def _round_up(x, m):
    return ((x + m - 1) // m) * m


def _minilm_kernel(tok_ref, gx_tab_ref, w_hh_ref, fc_w_ref, fc_b_ref, out_ref,
                   *, T, Bp, H):
    """LSTM recurrence + final projection, gate-packed into one 128-lane block.

    tok_ref    : (T*Bp, 1)  int32 token ids, time-major, batch padded
    gx_tab_ref : (Vs, 128)  per-token packed input-gate preactivations
                            (row v = E[v] @ W_ih^T + b, gates [i|f|g|o] in
                            lanes [0:4H], zeros elsewhere)
    w_hh_ref   : (H, 128)   hidden->gates weights, gate-packed (K = H)
    fc_w_ref   : (H, 128)   output projection (K = H, vocab in lanes [0:V])
    fc_b_ref   : (1, 128)   output bias
    out_ref    : (Bp, 128)  logits for the last timestep (lane-dense tile)
    """
    Vs, L = gx_tab_ref.shape

    # ---- In-kernel embedding lookup + input projection: a single MXU pass
    #      one_hot(tokens) @ gx_tab. Result (T*Bp, L) = 8 vregs, kept in
    #      registers and sliced statically per timestep (no scratch).
    tok = tok_ref[...]                                           # (T*Bp, 1) i32
    vocab_iota = jax.lax.broadcasted_iota(jnp.int32, (T * Bp, Vs), 1)
    onehot = jnp.where(vocab_iota == tok, 1.0, 0.0).astype(jnp.float32)
    gx_all = jnp.dot(onehot, gx_tab_ref[...],
                     preferred_element_type=jnp.float32)          # (T*Bp, L)

    w_hh = w_hh_ref[...]                                          # (H, L): 1 tile

    lane = jax.lax.broadcasted_iota(jnp.int32, (Bp, L), 1)
    is_g_gate = (lane >= 2 * H) & (lane < 3 * H)                  # tanh gate

    h = jnp.zeros((Bp, L), jnp.float32)
    c = jnp.zeros((Bp, L), jnp.float32)

    # ---- Fully unrolled recurrence (T small & static). Only one small
    #      h @ W_hh MXU push per step is on the serial chain.
    for t in range(T):
        gx_t = gx_all[t * Bp:(t + 1) * Bp, :]                     # static slice
        if t == 0:
            gates = gx_t                     # h == 0: skip the first MXU push
        else:
            gates = gx_t + jnp.dot(h[:, :H], w_hh,
                                   preferred_element_type=jnp.float32)
        # One tanh + one sigmoid over the whole packed vreg, split by lane mask.
        act = jnp.where(is_g_gate, jnp.tanh(gates), jax.nn.sigmoid(gates))
        i_a = act                                                 # i @ lanes[0:H]
        f_a = pltpu.roll(act, shift=L - H, axis=1)                # f -> lanes[0:H]
        g_a = pltpu.roll(act, shift=L - 2 * H, axis=1)            # g -> lanes[0:H]
        o_a = pltpu.roll(act, shift=L - 3 * H, axis=1)            # o -> lanes[0:H]
        c = f_a * c + i_a * g_a
        h = o_a * jnp.tanh(c)
        # Only lanes [0:H] of h/c are meaningful; lanes >= H carry bounded
        # junk that never reaches the dots because we contract h[:, :H] only.

    # ---- Final projection on the last hidden state; one unmasked (8,128) store.
    out_ref[...] = (
        jnp.dot(h[:, :H], fc_w_ref[...], preferred_element_type=jnp.float32)
        + fc_b_ref[...])


def init_params(key, vocab_size=10, hidden_dim=8):
    ks = jax.random.split(key, 7)
    H, V = hidden_dim, vocab_size
    scale = 1.0 / jnp.sqrt(H)
    return {
        "embedding": jax.random.normal(ks[0], (V, H), jnp.float32),
        # PyTorch LSTM weight shapes: (4H, H); gate order [i, f, g, o]
        "w_ih": jax.random.uniform(ks[1], (4 * H, H), jnp.float32, -scale, scale),
        "w_hh": jax.random.uniform(ks[2], (4 * H, H), jnp.float32, -scale, scale),
        "b_ih": jax.random.uniform(ks[3], (4 * H,), jnp.float32, -scale, scale),
        "b_hh": jax.random.uniform(ks[4], (4 * H,), jnp.float32, -scale, scale),
        # nn.Linear(hidden_dim, vocab_size): weight (V, H), bias (V,)
        "fc_w": jax.random.uniform(ks[5], (V, H), jnp.float32, -scale, scale),
        "fc_b": jax.random.uniform(ks[6], (V,), jnp.float32, -scale, scale),
    }


def prepare_params(params):
    """One-time weight packing/padding (NOT on the per-call forward path)."""
    V, H = params["embedding"].shape
    assert 4 * H <= _LANES, "gate packing assumes 4*hidden_dim <= 128"
    Vs = _round_up(V, _SUBLANES)      # vocab padded to a sublane multiple
    Vp = _round_up(V, _LANES)         # output lanes

    b = params["b_ih"] + params["b_hh"]                              # (4H,)
    # Token -> packed input-gate preactivations: row v = E[v] @ W_ih^T + b.
    gx_tab = jnp.dot(params["embedding"], params["w_ih"].T,
                     precision=jax.lax.Precision.HIGHEST) + b        # (V, 4H)
    gx_tab_p = jnp.zeros((Vs, _LANES), jnp.float32).at[:V, :4 * H].set(gx_tab)
    w_hh_p = jnp.zeros((H, _LANES), jnp.float32).at[:, :4 * H].set(params["w_hh"].T)
    fc_w_p = jnp.zeros((H, Vp), jnp.float32).at[:, :V].set(params["fc_w"].T)
    fc_b_p = jnp.zeros((1, Vp), jnp.float32).at[0, :V].set(params["fc_b"])
    return dict(gx_tab=gx_tab_p, w_hh=w_hh_p, fc_w=fc_w_p, fc_b=fc_b_p, H=H, V=V)


def make_minilm_forward(params):
    """Returns a jitted forward(tokens) -> logits using cached packed weights."""
    prep = prepare_params(params)
    H, V = prep["H"], prep["V"]
    gx_tab, w_hh, fc_w, fc_b = (prep["gx_tab"], prep["w_hh"],
                                prep["fc_w"], prep["fc_b"])
    Vp = fc_w.shape[1]

    @jax.jit
    def forward(tokens):
        B, T = tokens.shape
        Bp = _round_up(B, _SUBLANES)
        # Tiny int-only glue (fused under jit): time-major, batch padded.
        tok_tm = jnp.transpose(tokens.astype(jnp.int32))             # (T, B)
        tok_tm = jnp.pad(tok_tm, ((0, 0), (0, Bp - B)))              # (T, Bp)
        tok_tm = tok_tm.reshape(T * Bp, 1)

        vmem = pl.BlockSpec(memory_space=pltpu.MemorySpace.VMEM)
        # TODO(synk): for non-trivial batch sizes add a batch grid axis with
        # dimension_semantics=("parallel",) so v7x's two TensorCores are used.
        out_p = pl.pallas_call(
            partial(_minilm_kernel, T=T, Bp=Bp, H=H),
            out_shape=jax.ShapeDtypeStruct((Bp, Vp), jnp.float32),
            in_specs=[vmem] * 5,
            out_specs=vmem,
        )(tok_tm, gx_tab, w_hh, fc_w, fc_b)
        return out_p[:B, :V]

    return forward


def minilm_reference(tokens, params):
    """Pure-JAX reference matching torch semantics."""
    emb = params["embedding"][tokens]                                # (B, T, H)
    B, T, H = emb.shape
    w_ih, w_hh = params["w_ih"], params["w_hh"]
    b = params["b_ih"] + params["b_hh"]
    h = jnp.zeros((B, H), jnp.float32)
    c = jnp.zeros((B, H), jnp.float32)
    for t in range(T):
        gates = emb[:, t, :] @ w_ih.T + h @ w_hh.T + b
        i_g = jax.nn.sigmoid(gates[:, 0 * H:1 * H])
        f_g = jax.nn.sigmoid(gates[:, 1 * H:2 * H])
        g_g = jnp.tanh(gates[:, 2 * H:3 * H])
        o_g = jax.nn.sigmoid(gates[:, 3 * H:4 * H])
        c = f_g * c + i_g * g_g
        h = o_g * jnp.tanh(c)
    return h @ params["fc_w"].T + params["fc_b"]


if __name__ == "__main__":
    key = jax.random.PRNGKey(0)
    k_params, k_tok = jax.random.split(key)

    vocab_size, hidden_dim = 10, 8
    batch, seq = 2, 8

    params = init_params(k_params, vocab_size, hidden_dim)
    tokens = jax.random.randint(k_tok, (batch, seq), 0, vocab_size,
                                dtype=jnp.int32)

    forward = make_minilm_forward(params)     # one-time weight prep + jit
    logits = jax.block_until_ready(forward(tokens))

    ref = minilm_reference(tokens, params)
    assert logits.shape == (batch, vocab_size)
    assert jnp.allclose(logits, ref, atol=1e-5, rtol=1e-5), (
        f"mismatch: max err {jnp.max(jnp.abs(logits - ref))}")

    print("KERNEL_OK")
</pallas_src>

<mosaic_0001>
module attributes {stable_mosaic.version = 11 : i64} {
  func.func @_minilm_kernel(%arg0: memref<64x1xi32, #tpu.memory_space<vmem>>, %arg1: memref<16x128xf32, #tpu.memory_space<vmem>>, %arg2: memref<8x128xf32, #tpu.memory_space<vmem>>, %arg3: memref<8x128xf32, #tpu.memory_space<vmem>>, %arg4: memref<1x128xf32, #tpu.memory_space<vmem>>, %arg5: memref<8x128xf32, #tpu.memory_space<vmem>>) attributes {dimension_semantics = [], scalar_prefetch = 0 : i64, scratch_operands = 0 : i64, tpu.core_type = #tpu.core_type<tc>} {
    %c0 = arith.constant 0 : index
    %c0_0 = arith.constant 0 : index
    %0 = vector.load %arg0[%c0, %c0_0] : memref<64x1xi32, #tpu.memory_space<vmem>>, vector<64x1xi32>
    %1 = tpu.iota {dimensions = array<i32: 1>} : vector<64x16xi32>
    %2 = vector.broadcast %0 : vector<64x1xi32> to vector<64x16xi32>
    %3 = arith.cmpi eq, %1, %2 : vector<64x16xi32>
    %cst = arith.constant 1.000000e+00 : f32
    %cst_1 = arith.constant 0.000000e+00 : f32
    %4 = vector.broadcast %cst : f32 to vector<64x16xf32>
    %5 = vector.broadcast %cst_1 : f32 to vector<64x16xf32>
    %6 = arith.select %3, %4, %5 : vector<64x16xi1>, vector<64x16xf32>
    %c0_2 = arith.constant 0 : index
    %c0_3 = arith.constant 0 : index
    %7 = vector.load %arg1[%c0_2, %c0_3] : memref<16x128xf32, #tpu.memory_space<vmem>>, vector<16x128xf32>
    %cst_4 = arith.constant dense<0.000000e+00> : vector<64x128xf32>
    %8 = tpu.matmul %6, %7, %cst_4 {dimension_numbers = #tpu.dot_dimension_numbers<[1], [0], [0], [1], [0, 0, 1, 1], [], []>} : vector<64x16xf32>, vector<16x128xf32>, vector<64x128xf32> -> vector<64x128xf32>
    %c0_5 = arith.constant 0 : index
    %c0_6 = arith.constant 0 : index
    %9 = vector.load %arg2[%c0_5, %c0_6] : memref<8x128xf32, #tpu.memory_space<vmem>>, vector<8x128xf32>
    %10 = tpu.iota {dimensions = array<i32: 1>} : vector<8x128xi32>
    %c16_i32 = arith.constant 16 : i32
    %11 = vector.broadcast %c16_i32 : i32 to vector<8x128xi32>
    %12 = arith.cmpi sge, %10, %11 : vector<8x128xi32>
    %c24_i32 = arith.constant 24 : i32
    %13 = vector.broadcast %c24_i32 : i32 to vector<8x128xi32>
    %14 = arith.cmpi slt, %10, %13 : vector<8x128xi32>
    %15 = arith.andi %12, %14 : vector<8x128xi1>
    %cst_7 = arith.constant 0.000000e+00 : f32
    %16 = vector.broadcast %cst_7 : f32 to vector<8x128xf32>
    %17 = vector.extract_strided_slice %8 {offsets = [0, 0], sizes = [8, 128], strides = [1, 1]} : vector<64x128xf32> to vector<8x128xf32>
    %18 = math.tanh %17 : vector<8x128xf32>
    %19 = arith.negf %17 : vector<8x128xf32>
    %20 = math.exp %19 : vector<8x128xf32>
    %cst_8 = arith.constant 1.000000e+00 : f32
    %21 = vector.broadcast %cst_8 : f32 to vector<8x128xf32>
    %22 = arith.addf %21, %20 : vector<8x128xf32>
    %23 = arith.divf %21, %22 : vector<8x128xf32>
    %24 = arith.select %15, %18, %23 : vector<8x128xi1>, vector<8x128xf32>
    %c120_i32 = arith.constant 120 : i32
    %25 = tpu.dynamic_rotate %24 by %c120_i32 dim 1 : vector<8x128xf32>, i32 -> vector<8x128xf32>
    %c112_i32 = arith.constant 112 : i32
    %26 = tpu.dynamic_rotate %24 by %c112_i32 dim 1 : vector<8x128xf32>, i32 -> vector<8x128xf32>
    %c104_i32 = arith.constant 104 : i32
    %27 = tpu.dynamic_rotate %24 by %c104_i32 dim 1 : vector<8x128xf32>, i32 -> vector<8x128xf32>
    %28 = arith.mulf %25, %16 : vector<8x128xf32>
    %29 = arith.mulf %24, %26 : vector<8x128xf32>
    %30 = arith.addf %28, %29 : vector<8x128xf32>
    %31 = math.tanh %30 : vector<8x128xf32>
    %32 = arith.mulf %27, %31 : vector<8x128xf32>
    %33 = vector.extract_strided_slice %8 {offsets = [8, 0], sizes = [8, 128], strides = [1, 1]} : vector<64x128xf32> to vector<8x128xf32>
    %34 = vector.extract_strided_slice %32 {offsets = [0, 0], sizes = [8, 8], strides = [1, 1]} : vector<8x128xf32> to vector<8x8xf32>
    %cst_9 = arith.constant dense<0.000000e+00> : vector<8x128xf32>
    %35 = tpu.matmul %34, %9, %cst_9 {dimension_numbers = #tpu.dot_dimension_numbers<[1], [0], [0], [1], [0, 0, 1, 1], [], []>} : vector<8x8xf32>, vector<8x128xf32>, vector<8x128xf32> -> vector<8x128xf32>
    %36 = arith.addf %33, %35 : vector<8x128xf32>
    %37 = math.tanh %36 : vector<8x128xf32>
    %38 = arith.negf %36 : vector<8x128xf32>
    %39 = math.exp %38 : vector<8x128xf32>
    %cst_10 = arith.constant 1.000000e+00 : f32
    %40 = vector.broadcast %cst_10 : f32 to vector<8x128xf32>
    %41 = arith.addf %40, %39 : vector<8x128xf32>
    %42 = arith.divf %40, %41 : vector<8x128xf32>
    %43 = arith.select %15, %37, %42 : vector<8x128xi1>, vector<8x128xf32>
    %c120_i32_11 = arith.constant 120 : i32
    %44 = tpu.dynamic_rotate %43 by %c120_i32_11 dim 1 : vector<8x128xf32>, i32 -> vector<8x128xf32>
    %c112_i32_12 = arith.constant 112 : i32
    %45 = tpu.dynamic_rotate %43 by %c112_i32_12 dim 1 : vector<8x128xf32>, i32 -> vector<8x128xf32>
    %c104_i32_13 = arith.constant 104 : i32
    %46 = tpu.dynamic_rotate %43 by %c104_i32_13 dim 1 : vector<8x128xf32>, i32 -> vector<8x128xf32>
    %47 = arith.mulf %44, %30 : vector<8x128xf32>
    %48 = arith.mulf %43, %45 : vector<8x128xf32>
    %49 = arith.addf %47, %48 : vector<8x128xf32>
    %50 = math.tanh %49 : vector<8x128xf32>
    %51 = arith.mulf %46, %50 : vector<8x128xf32>
    %52 = vector.extract_strided_slice %8 {offsets = [16, 0], sizes = [8, 128], strides = [1, 1]} : vector<64x128xf32> to vector<8x128xf32>
    %53 = vector.extract_strided_slice %51 {offsets = [0, 0], sizes = [8, 8], strides = [1, 1]} : vector<8x128xf32> to vector<8x8xf32>
    %cst_14 = arith.constant dense<0.000000e+00> : vector<8x128xf32>
    %54 = tpu.matmul %53, %9, %cst_14 {dimension_numbers = #tpu.dot_dimension_numbers<[1], [0], [0], [1], [0, 0, 1, 1], [], []>} : vector<8x8xf32>, vector<8x128xf32>, vector<8x128xf32> -> vector<8x128xf32>
    %55 = arith.addf %52, %54 : vector<8x128xf32>
    %56 = math.tanh %55 : vector<8x128xf32>
    %57 = arith.negf %55 : vector<8x128xf32>
    %58 = math.exp %57 : vector<8x128xf32>
    %cst_15 = arith.constant 1.000000e+00 : f32
    %59 = vector.broadcast %cst_15 : f32 to vector<8x128xf32>
    %60 = arith.addf %59, %58 : vector<8x128xf32>
    %61 = arith.divf %59, %60 : vector<8x128xf32>
    %62 = arith.select %15, %56, %61 : vector<8x128xi1>, vector<8x128xf32>
    %c120_i32_16 = arith.constant 120 : i32
    %63 = tpu.dynamic_rotate %62 by %c120_i32_16 dim 1 : vector<8x128xf32>, i32 -> vector<8x128xf32>
    %c112_i32_17 = arith.constant 112 : i32
    %64 = tpu.dynamic_rotate %62 by %c112_i32_17 dim 1 : vector<8x128xf32>, i32 -> vector<8x128xf32>
    %c104_i32_18 = arith.constant 104 : i32
    %65 = tpu.dynamic_rotate %62 by %c104_i32_18 dim 1 : vector<8x128xf32>, i32 -> vector<8x128xf32>
    %66 = arith.mulf %63, %49 : vector<8x128xf32>
    %67 = arith.mulf %62, %64 : vector<8x128xf32>
    %68 = arith.addf %66, %67 : vector<8x128xf32>
    %69 = math.tanh %68 : vector<8x128xf32>
    %70 = arith.mulf %65, %69 : vector<8x128xf32>
    %71 = vector.extract_strided_slice %8 {offsets = [24, 0], sizes = [8, 128], strides = [1, 1]} : vector<64x128xf32> to vector<8x128xf32>
    %72 = vector.extract_strided_slice %70 {offsets = [0, 0], sizes = [8, 8], strides = [1, 1]} : vector<8x128xf32> to vector<8x8xf32>
    %cst_19 = arith.constant dense<0.000000e+00> : vector<8x128xf32>
    %73 = tpu.matmul %72, %9, %cst_19 {dimension_numbers = #tpu.dot_dimension_numbers<[1], [0], [0], [1], [0, 0, 1, 1], [], []>} : vector<8x8xf32>, vector<8x128xf32>, vector<8x128xf32> -> vector<8x128xf32>
    %74 = arith.addf %71, %73 : vector<8x128xf32>
    %75 = math.tanh %74 : vector<8x128xf32>
    %76 = arith.negf %74 : vector<8x128xf32>
    %77 = math.exp %76 : vector<8x128xf32>
    %cst_20 = arith.constant 1.000000e+00 : f32
    %78 = vector.broadcast %cst_20 : f32 to vector<8x128xf32>
    %79 = arith.addf %78, %77 : vector<8x128xf32>
    %80 = arith.divf %78, %79 : vector<8x128xf32>
    %81 = arith.select %15, %75, %80 : vector<8x128xi1>, vector<8x128xf32>
    %c120_i32_21 = arith.constant 120 : i32
    %82 = tpu.dynamic_rotate %81 by %c120_i32_21 dim 1 : vector<8x128xf32>, i32 -> vector<8x128xf32>
    %c112_i32_22 = arith.constant 112 : i32
    %83 = tpu.dynamic_rotate %81 by %c112_i32_22 dim 1 : vector<8x128xf32>, i32 -> vector<8x128xf32>
    %c104_i32_23 = arith.constant 104 : i32
    %84 = tpu.dynamic_rotate %81 by %c104_i32_23 dim 1 : vector<8x128xf32>, i32 -> vector<8x128xf32>
    %85 = arith.mulf %82, %68 : vector<8x128xf32>
    %86 = arith.mulf %81, %83 : vector<8x128xf32>
    %87 = arith.addf %85, %86 : vector<8x128xf32>
    %88 = math.tanh %87 : vector<8x128xf32>
    %89 = arith.mulf %84, %88 : vector<8x128xf32>
    %90 = vector.extract_strided_slice %8 {offsets = [32, 0], sizes = [8, 128], strides = [1, 1]} : vector<64x128xf32> to vector<8x128xf32>
    %91 = vector.extract_strided_slice %89 {offsets = [0, 0], sizes = [8, 8], strides = [1, 1]} : vector<8x128xf32> to vector<8x8xf32>
    %cst_24 = arith.constant dense<0.000000e+00> : vector<8x128xf32>
    %92 = tpu.matmul %91, %9, %cst_24 {dimension_numbers = #tpu.dot_dimension_numbers<[1], [0], [0], [1], [0, 0, 1, 1], [], []>} : vector<8x8xf32>, vector<8x128xf32>, vector<8x128xf32> -> vector<8x128xf32>
    %93 = arith.addf %90, %92 : vector<8x128xf32>
    %94 = math.tanh %93 : vector<8x128xf32>
    %95 = arith.negf %93 : vector<8x128xf32>
    %96 = math.exp %95 : vector<8x128xf32>
    %cst_25 = arith.constant 1.000000e+00 : f32
    %97 = vector.broadcast %cst_25 : f32 to vector<8x128xf32>
    %98 = arith.addf %97, %96 : vector<8x128xf32>
    %99 = arith.divf %97, %98 : vector<8x128xf32>
    %100 = arith.select %15, %94, %99 : vector<8x128xi1>, vector<8x128xf32>
    %c120_i32_26 = arith.constant 120 : i32
    %101 = tpu.dynamic_rotate %100 by %c120_i32_26 dim 1 : vector<8x128xf32>, i32 -> vector<8x128xf32>
    %c112_i32_27 = arith.constant 112 : i32
    %102 = tpu.dynamic_rotate %100 by %c112_i32_27 dim 1 : vector<8x128xf32>, i32 -> vector<8x128xf32>
    %c104_i32_28 = arith.constant 104 : i32
    %103 = tpu.dynamic_rotate %100 by %c104_i32_28 dim 1 : vector<8x128xf32>, i32 -> vector<8x128xf32>
    %104 = arith.mulf %101, %87 : vector<8x128xf32>
    %105 = arith.mulf %100, %102 : vector<8x128xf32>
    %106 = arith.addf %104, %105 : vector<8x128xf32>
    %107 = math.tanh %106 : vector<8x128xf32>
    %108 = arith.mulf %103, %107 : vector<8x128xf32>
    %109 = vector.extract_strided_slice %8 {offsets = [40, 0], sizes = [8, 128], strides = [1, 1]} : vector<64x128xf32> to vector<8x128xf32>
    %110 = vector.extract_strided_slice %108 {offsets = [0, 0], sizes = [8, 8], strides = [1, 1]} : vector<8x128xf32> to vector<8x8xf32>
    %cst_29 = arith.constant dense<0.000000e+00> : vector<8x128xf32>
    %111 = tpu.matmul %110, %9, %cst_29 {dimension_numbers = #tpu.dot_dimension_numbers<[1], [0], [0], [1], [0, 0, 1, 1], [], []>} : vector<8x8xf32>, vector<8x128xf32>, vector<8x128xf32> -> vector<8x128xf32>
    %112 = arith.addf %109, %111 : vector<8x128xf32>
    %113 = math.tanh %112 : vector<8x128xf32>
    %114 = arith.negf %112 : vector<8x128xf32>
    %115 = math.exp %114 : vector<8x128xf32>
    %cst_30 = arith.constant 1.000000e+00 : f32
    %116 = vector.broadcast %cst_30 : f32 to vector<8x128xf32>
    %117 = arith.addf %116, %115 : vector<8x128xf32>
    %118 = arith.divf %116, %117 : vector<8x128xf32>
    %119 = arith.select %15, %113, %118 : vector<8x128xi1>, vector<8x128xf32>
    %c120_i32_31 = arith.constant 120 : i32
    %120 = tpu.dynamic_rotate %119 by %c120_i32_31 dim 1 : vector<8x128xf32>, i32 -> vector<8x128xf32>
    %c112_i32_32 = arith.constant 112 : i32
    %121 = tpu.dynamic_rotate %119 by %c112_i32_32 dim 1 : vector<8x128xf32>, i32 -> vector<8x128xf32>
    %c104_i32_33 = arith.constant 104 : i32
    %122 = tpu.dynamic_rotate %119 by %c104_i32_33 dim 1 : vector<8x128xf32>, i32 -> vector<8x128xf32>
    %123 = arith.mulf %120, %106 : vector<8x128xf32>
    %124 = arith.mulf %119, %121 : vector<8x128xf32>
    %125 = arith.addf %123, %124 : vector<8x128xf32>
    %126 = math.tanh %125 : vector<8x128xf32>
    %127 = arith.mulf %122, %126 : vector<8x128xf32>
    %128 = vector.extract_strided_slice %8 {offsets = [48, 0], sizes = [8, 128], strides = [1, 1]} : vector<64x128xf32> to vector<8x128xf32>
    %129 = vector.extract_strided_slice %127 {offsets = [0, 0], sizes = [8, 8], strides = [1, 1]} : vector<8x128xf32> to vector<8x8xf32>
    %cst_34 = arith.constant dense<0.000000e+00> : vector<8x128xf32>
    %130 = tpu.matmul %129, %9, %cst_34 {dimension_numbers = #tpu.dot_dimension_numbers<[1], [0], [0], [1], [0, 0, 1, 1], [], []>} : vector<8x8xf32>, vector<8x128xf32>, vector<8x128xf32> -> vector<8x128xf32>
    %131 = arith.addf %128, %130 : vector<8x128xf32>
    %132 = math.tanh %131 : vector<8x128xf32>
    %133 = arith.negf %131 : vector<8x128xf32>
    %134 = math.exp %133 : vector<8x128xf32>
    %cst_35 = arith.constant 1.000000e+00 : f32
    %135 = vector.broadcast %cst_35 : f32 to vector<8x128xf32>
    %136 = arith.addf %135, %134 : vector<8x128xf32>
    %137 = arith.divf %135, %136 : vector<8x128xf32>
    %138 = arith.select %15, %132, %137 : vector<8x128xi1>, vector<8x128xf32>
    %c120_i32_36 = arith.constant 120 : i32
    %139 = tpu.dynamic_rotate %138 by %c120_i32_36 dim 1 : vector<8x128xf32>, i32 -> vector<8x128xf32>
    %c112_i32_37 = arith.constant 112 : i32
    %140 = tpu.dynamic_rotate %138 by %c112_i32_37 dim 1 : vector<8x128xf32>, i32 -> vector<8x128xf32>
    %c104_i32_38 = arith.constant 104 : i32
    %141 = tpu.dynamic_rotate %138 by %c104_i32_38 dim 1 : vector<8x128xf32>, i32 -> vector<8x128xf32>
    %142 = arith.mulf %139, %125 : vector<8x128xf32>
    %143 = arith.mulf %138, %140 : vector<8x128xf32>
    %144 = arith.addf %142, %143 : vector<8x128xf32>
    %145 = math.tanh %144 : vector<8x128xf32>
    %146 = arith.mulf %141, %145 : vector<8x128xf32>
    %147 = vector.extract_strided_slice %8 {offsets = [56, 0], sizes = [8, 128], strides = [1, 1]} : vector<64x128xf32> to vector<8x128xf32>
    %148 = vector.extract_strided_slice %146 {offsets = [0, 0], sizes = [8, 8], strides = [1, 1]} : vector<8x128xf32> to vector<8x8xf32>
    %cst_39 = arith.constant dense<0.000000e+00> : vector<8x128xf32>
    %149 = tpu.matmul %148, %9, %cst_39 {dimension_numbers = #tpu.dot_dimension_numbers<[1], [0], [0], [1], [0, 0, 1, 1], [], []>} : vector<8x8xf32>, vector<8x128xf32>, vector<8x128xf32> -> vector<8x128xf32>
    %150 = arith.addf %147, %149 : vector<8x128xf32>
    %151 = math.tanh %150 : vector<8x128xf32>
    %152 = arith.negf %150 : vector<8x128xf32>
    %153 = math.exp %152 : vector<8x128xf32>
    %cst_40 = arith.constant 1.000000e+00 : f32
    %154 = vector.broadcast %cst_40 : f32 to vector<8x128xf32>
    %155 = arith.addf %154, %153 : vector<8x128xf32>
    %156 = arith.divf %154, %155 : vector<8x128xf32>
    %157 = arith.select %15, %151, %156 : vector<8x128xi1>, vector<8x128xf32>
    %c120_i32_41 = arith.constant 120 : i32
    %158 = tpu.dynamic_rotate %157 by %c120_i32_41 dim 1 : vector<8x128xf32>, i32 -> vector<8x128xf32>
    %c112_i32_42 = arith.constant 112 : i32
    %159 = tpu.dynamic_rotate %157 by %c112_i32_42 dim 1 : vector<8x128xf32>, i32 -> vector<8x128xf32>
    %c104_i32_43 = arith.constant 104 : i32
    %160 = tpu.dynamic_rotate %157 by %c104_i32_43 dim 1 : vector<8x128xf32>, i32 -> vector<8x128xf32>
    %161 = arith.mulf %158, %144 : vector<8x128xf32>
    %162 = arith.mulf %157, %159 : vector<8x128xf32>
    %163 = arith.addf %161, %162 : vector<8x128xf32>
    %164 = math.tanh %163 : vector<8x128xf32>
    %165 = arith.mulf %160, %164 : vector<8x128xf32>
    %166 = vector.extract_strided_slice %165 {offsets = [0, 0], sizes = [8, 8], strides = [1, 1]} : vector<8x128xf32> to vector<8x8xf32>
    %c0_44 = arith.constant 0 : index
    %c0_45 = arith.constant 0 : index
    %167 = vector.load %arg3[%c0_44, %c0_45] : memref<8x128xf32, #tpu.memory_space<vmem>>, vector<8x128xf32>
    %cst_46 = arith.constant dense<0.000000e+00> : vector<8x128xf32>
    %168 = tpu.matmul %166, %167, %cst_46 {dimension_numbers = #tpu.dot_dimension_numbers<[1], [0], [0], [1], [0, 0, 1, 1], [], []>} : vector<8x8xf32>, vector<8x128xf32>, vector<8x128xf32> -> vector<8x128xf32>
    %c0_47 = arith.constant 0 : index
    %c0_48 = arith.constant 0 : index
    %169 = vector.load %arg4[%c0_47, %c0_48] : memref<1x128xf32, #tpu.memory_space<vmem>>, vector<1x128xf32>
    %170 = vector.broadcast %169 : vector<1x128xf32> to vector<8x128xf32>
    %171 = arith.addf %168, %170 : vector<8x128xf32>
    %c0_49 = arith.constant 0 : index
    %c0_50 = arith.constant 0 : index
    %172 = vector.load %arg5[%c0_49, %c0_50] : memref<8x128xf32, #tpu.memory_space<vmem>>, vector<8x128xf32>
    tpu.vector_store %arg5[%c0_49, %c0_50], %171 {strides = array<i32>} : memref<8x128xf32, #tpu.memory_space<vmem>>, vector<8x128xf32>,
    return
  }
}

</mosaic_0001>

<llo_original>
// kernel: forward.1
$region0: #{forward.1}
  #allocation0 [shape = 'u32[]', space=smem, size = 0x4, offset = 0x4, fixed_abs, tag = 'smem constant byte address 0x4 - core index']
  #allocation1 [shape = 'u32[144,128]{1,0:T(1,128)}', space=vmem, size = 0x12000, scoped, tag = 'internal scratch']
  %s0 = inlined_call_operand.vmem [shape: s32[64,1], index: 0, kind: input, shape index: {}]
  %s1 = inlined_call_operand.vmem [shape: f32[16,128], index: 1, kind: input, shape index: {}]
  %s2 = inlined_call_operand.vmem [shape: f32[8,128], index: 2, kind: input, shape index: {}]
  %s3 = inlined_call_operand.vmem [shape: f32[8,128], index: 3, kind: input, shape index: {}]
  %s4 = inlined_call_operand.vmem [shape: f32[1,128], index: 4, kind: input, shape index: {}]
  %s5 = inlined_call_operand.vmem [shape: f32[8,128], index: 5, kind: output, shape index: {}]
  %s6 = sld [smem:[#allocation0]]
  $region30: #{forward.1} parent=0
    _
  %s8 = ssub.s32 1, %s6
  %s9 = scalar_select 0, %s8, %s6
  // Predicated region
  $region2: #{forward.1} parent=0 // pred_check
    _
  $region3: #{forward.1} parent=0 // pred_check_branch
    %11 = sbr.rel (0) target = $region5
  $region4: #{forward.1} parent=0 // pred_region
    _
  $region5: #{forward.1} parent=0 // pred_fallthru
    _
  // Predicated region
  $region6: #{forward.1} parent=0 // pred_check
    _
  $region7: #{forward.1} parent=0 // pred_check_branch
    %13 = sbr.rel (0) target = $region9
  $region8: #{forward.1} parent=0 // pred_region
    _
  $region9: #{forward.1} parent=0 // pred_fallthru
    _
  // Predicated region
  $region10: #{forward.1} parent=0 // pred_check
    _
  $region11: #{forward.1} parent=0 // pred_check_branch
    %15 = sbr.rel (0) target = $region13
  $region12: #{forward.1} parent=0 // pred_region
    _
  $region13: #{forward.1} parent=0 // pred_fallthru
    _
  // Predicated region
  $region14: #{forward.1} parent=0 // pred_check
    _
  $region15: #{forward.1} parent=0 // pred_check_branch
    %17 = sbr.rel (0) target = $region17
  $region16: #{forward.1} parent=0 // pred_region
    _
  $region17: #{forward.1} parent=0 // pred_fallthru
    _
  // Predicated region
  $region18: #{forward.1} parent=0 // pred_check
    _
  $region19: #{forward.1} parent=0 // pred_check_branch
    %19 = sbr.rel (0) target = $region21
  $region20: #{forward.1} parent=0 // pred_region
    _
  $region21: #{forward.1} parent=0 // pred_fallthru
    _
  %v20 = vld [vmem:[%s0] sm:$0xff]
  %v21 = vld [vmem:[%s0 + $0x8] sm:$0xff]
  %v22 = vld [vmem:[%s0 + $0x10] sm:$0xff]
  %v23 = vld [vmem:[%s0 + $0x18] sm:$0xff]
  %v24 = vld [vmem:[%s0 + $0x20] sm:$0xff]
  %v25 = vld [vmem:[%s0 + $0x28] sm:$0xff]
  %v26 = vld [vmem:[%s0 + $0x30] sm:$0xff]
  %v27 = vld [vmem:[%s0 + $0x38] sm:$0xff]
  %v28 = vlaneseq
  %v29 = vand.u32 %v28, 127
  %30 = vset.pattern.permute.xlu0 0
  %31 = vperm.xlu0 %30, %v20
  %v32 = vpop.permute.xlu0 %31
  %33 = vset.pattern.permute.xlu0 0
  %34 = vperm.xlu0 %33, %v21
  %v35 = vpop.permute.xlu0 %34
  %36 = vset.pattern.permute.xlu0 0
  %37 = vperm.xlu0 %36, %v22
  %v38 = vpop.permute.xlu0 %37
  %39 = vset.pattern.permute.xlu0 0
  %40 = vperm.xlu0 %39, %v23
  %v41 = vpop.permute.xlu0 %40
  %42 = vset.pattern.permute.xlu0 0
  %43 = vperm.xlu0 %42, %v24
  %v44 = vpop.permute.xlu0 %43
  %45 = vset.pattern.permute.xlu0 0
  %46 = vperm.xlu0 %45, %v25
  %v47 = vpop.permute.xlu0 %46
  %48 = vset.pattern.permute.xlu0 0
  %49 = vperm.xlu0 %48, %v26
  %v50 = vpop.permute.xlu0 %49
  %51 = vset.pattern.permute.xlu0 0
  %52 = vperm.xlu0 %51, %v27
  %v53 = vpop.permute.xlu0 %52
  %vm54 = vcmp.eq.s32.totalorder %v29, %v32
  %vm55 = vcmp.eq.s32.totalorder %v29, %v35
  %vm56 = vcmp.eq.s32.totalorder %v29, %v38
  %vm57 = vcmp.eq.s32.totalorder %v29, %v41
  %vm58 = vcmp.eq.s32.totalorder %v29, %v44
  %vm59 = vcmp.eq.s32.totalorder %v29, %v47
  %vm60 = vcmp.eq.s32.totalorder %v29, %v50
  %vm61 = vcmp.eq.s32.totalorder %v29, %v53
  %v62 = vsel %vm54, 1.0, 0.0
  %v63 = vsel %vm55, 1.0, 0.0
  %v64 = vsel %vm56, 1.0, 0.0
  %v65 = vsel %vm57, 1.0, 0.0
  %v66 = vsel %vm58, 1.0, 0.0
  %v67 = vsel %vm59, 1.0, 0.0
  %v68 = vsel %vm60, 1.0, 0.0
  %v69 = vsel %vm61, 1.0, 0.0
  %v70 = vld [vmem:[%s1] sm:$0xff]
  %v71 = vld [vmem:[%s1 + $0x8] sm:$0xff]
  %vm72 = vcmask 130048
  %v74 = vsel %vm72, %v62, 0
  %v77 = vsel %vm72, %v63, 0
  %v80 = vsel %vm72, %v64, 0
  %v83 = vsel %vm72, %v65, 0
  %v86 = vsel %vm72, %v66, 0
  %v89 = vsel %vm72, %v67, 0
  %v92 = vsel %vm72, %v68, 0
  %v95 = vsel %vm72, %v69, 0
  %97 = vmatprep.subr.mxu0 0.0
  %98 = vmatpush1.msra.mxu0 0.0
  %99 = vmatprep.subr.mxu0 0.0
  %100 = vmatpush1.msra.mxu0 0.0
  %101 = vmatprep.subr.mxu0 0.0
  %102 = vmatpush1.msra.mxu0 0.0
  %103 = vmatprep.subr.mxu0 0.0
  %104 = vmatpush1.msra.mxu0 0.0
  %105 = vmatprep.subr.mxu0 0.0
  %106 = vmatpush1.msra.mxu0 0.0
  %107 = vmatprep.subr.mxu0 0.0
  %108 = vmatpush1.msra.mxu0 0.0
  %109 = vmatprep.subr.mxu0 0.0
  %110 = vmatpush1.msra.mxu0 0.0
  %111 = vmatprep.subr.mxu0 0.0
  %112 = vmatpush1.msra.mxu0 0.0
  %113 = vmatprep.subr.mxu0 0.0
  %114 = vmatpush1.msra.mxu0 0.0
  %115 = vmatprep.subr.mxu0 0.0
  %116 = vmatpush1.msra.mxu0 0.0
  %117 = vmatprep.subr.mxu0 0.0
  %118 = vmatpush1.msra.mxu0 0.0
  %119 = vmatprep.subr.mxu0 0.0
  %120 = vmatpush1.msra.mxu0 0.0
  %121 = vmatprep.subr.mxu0 0.0
  %122 = vmatpush1.msra.mxu0 0.0
  %123 = vmatprep.subr.mxu0 0.0
  %124 = vmatpush1.msra.mxu0 0.0
  %125 = vmatprep.subr.mxu0 0.0
  %126 = vmatpush1.msra.mxu0 %v71
  %127 = vmatprep.subr.mxu0 0.0
  %128 = vmatpush1.msra.mxu0 %v70
  %129 = vmatprep.subr.mxu0 0.0
  %130 = vmatpush2.msra.mxu0 0.0
  %131 = vmatprep.subr.mxu0 0.0
  %132 = vmatpush2.msra.mxu0 0.0
  %133 = vmatprep.subr.mxu0 0.0
  %134 = vmatpush2.msra.mxu0 0.0
  %135 = vmatprep.subr.mxu0 0.0
  %136 = vmatpush2.msra.mxu0 0.0
  %137 = vmatprep.subr.mxu0 0.0
  %138 = vmatpush2.msra.mxu0 0.0
  %139 = vmatprep.subr.mxu0 0.0
  %140 = vmatpush2.msra.mxu0 0.0
  %141 = vmatprep.subr.mxu0 0.0
  %142 = vmatpush2.msra.mxu0 0.0
  %143 = vmatprep.subr.mxu0 0.0
  %144 = vmatpush2.msra.mxu0 0.0
  %145 = vmatprep.subr.mxu0 0.0
  %146 = vmatpush2.msra.mxu0 0.0
  %147 = vmatprep.subr.mxu0 0.0
  %148 = vmatpush2.msra.mxu0 0.0
  %149 = vmatprep.subr.mxu0 0.0
  %150 = vmatpush2.msra.mxu0 0.0
  %151 = vmatprep.subr.mxu0 0.0
  %152 = vmatpush2.msra.mxu0 0.0
  %153 = vmatprep.subr.mxu0 0.0
  %154 = vmatpush2.msra.mxu0 0.0
  %155 = vmatprep.subr.mxu0 0.0
  %156 = vmatpush2.msra.mxu0 0.0
  %157 = vmatprep.subr.mxu0 0.0
  %158 = vmatpush2.msra.mxu0 0.0
  %159 = vmatprep.subr.mxu0 0.0
  %160 = vmatpush2.msra.mxu0 0.0
  %161 = vmatprep.mubr.f32.mxu0 0.0
  %162 = vmatmul.mubr.f32.gmra.mxu0 %v74
  %v163 = vpop.f32.mrf.mxu0
  %v164 = vadd.f32 0.0, %v163
  %v165 = vpop.f32.mrf.mxu0
  %166 = vmatprep.mubr.f32.mxu0 0.0
  %167 = vmatmul.mubr.f32.gmra.mxu0 %v77
  %v168 = vpop.f32.mrf.mxu0
  %v169 = vadd.f32 0.0, %v168
  %v170 = vpop.f32.mrf.mxu0
  %171 = vmatprep.mubr.f32.mxu0 0.0
  %172 = vmatmul.mubr.f32.gmra.mxu0 %v80
  %v173 = vpop.f32.mrf.mxu0
  %v174 = vadd.f32 0.0, %v173
  %v175 = vpop.f32.mrf.mxu0
  %176 = vmatprep.mubr.f32.mxu0 0.0
  %177 = vmatmul.mubr.f32.gmra.mxu0 %v83
  %v178 = vpop.f32.mrf.mxu0
  %v179 = vadd.f32 0.0, %v178
  %v180 = vpop.f32.mrf.mxu0
  %181 = vmatprep.mubr.f32.mxu0 0.0
  %182 = vmatmul.mubr.f32.gmra.mxu0 %v86
  %v183 = vpop.f32.mrf.mxu0
  %v184 = vadd.f32 0.0, %v183
  %v185 = vpop.f32.mrf.mxu0
  %186 = vmatprep.mubr.f32.mxu0 0.0
  %187 = vmatmul.mubr.f32.gmra.mxu0 %v89
  %v188 = vpop.f32.mrf.mxu0
  %v189 = vadd.f32 0.0, %v188
  %v190 = vpop.f32.mrf.mxu0
  %191 = vmatprep.mubr.f32.mxu0 0.0
  %192 = vmatmul.mubr.f32.gmra.mxu0 %v92
  %v193 = vpop.f32.mrf.mxu0
  %v194 = vadd.f32 0.0, %v193
  %v195 = vpop.f32.mrf.mxu0
  %196 = vmatprep.mubr.f32.mxu0 0.0
  %197 = vmatmul.mubr.f32.gmra.mxu0 %v95
  %v198 = vpop.f32.mrf.mxu0
  %v199 = vadd.f32 0.0, %v198
  %v200 = vpop.f32.mrf.mxu0
  %201 = vdwg.mxu0
  %v202 = vld [vmem:[%s2] sm:$0xff]
  %vm203 = vcmp.ge.s32.totalorder %v29, 16
  %vm204 = vcmp.lt.s32.totalorder %v29, 24
  %vm205 = vmand %vm203, %vm204
  %v206 = vtanh.pop %v164
  %v207 = vxor.u32 %v164, 2147483648
  %v208 = vmul.f32 %v207, 1.442695
  %v209 = vpow.pop %v208
  %v210 = vadd.f32 %v209, 1.0
  %v211 = vrcp.pop %v210
  %v212 = vmul.f32 1.0, %v211
  %v213 = vsel %vm205, %v206, %v212
  %214 = vrot.lane.b32.xlu0 %v213, 120
  %v215 = vpop.permute.xlu0 %214
  %216 = vrot.lane.b32.xlu0 %v213, 112
  %v217 = vpop.permute.xlu0 %216
  %218 = vrot.lane.b32.xlu0 %v213, 104
  %v219 = vpop.permute.xlu0 %218
  %v220 = vmul.f32 %v215, 0.0
  %v221 = vmul.f32 %v213, %v217
  %v222 = vadd.f32 %v220, %v221
  %v223 = vtanh.pop %v222
  %v224 = vmul.f32 %v219, %v223
  %vm225 = vcmask 64512
  %v227 = vsel %vm225, %v224, 0
  %229 = vmatprep.subr.mxu0 0.0
  %230 = vmatpush1.msra.mxu0 0.0
  %231 = vmatprep.subr.mxu0 0.0
  %232 = vmatpush1.msra.mxu0 0.0
  %233 = vmatprep.subr.mxu0 0.0
  %234 = vmatpush1.msra.mxu0 0.0
  %235 = vmatprep.subr.mxu0 0.0
  %236 = vmatpush1.msra.mxu0 0.0
  %237 = vmatprep.subr.mxu0 0.0
  %238 = vmatpush1.msra.mxu0 0.0
  %239 = vmatprep.subr.mxu0 0.0
  %240 = vmatpush1.msra.mxu0 0.0
  %241 = vmatprep.subr.mxu0 0.0
  %242 = vmatpush1.msra.mxu0 0.0
  %243 = vmatprep.subr.mxu0 0.0
  %244 = vmatpush1.msra.mxu0 0.0
  %245 = vmatprep.subr.mxu0 0.0
  %246 = vmatpush1.msra.mxu0 0.0
  %247 = vmatprep.subr.mxu0 0.0
  %248 = vmatpush1.msra.mxu0 0.0
  %249 = vmatprep.subr.mxu0 0.0
  %250 = vmatpush1.msra.mxu0 0.0
  %251 = vmatprep.subr.mxu0 0.0
  %252 = vmatpush1.msra.mxu0 0.0
  %253 = vmatprep.subr.mxu0 0.0
  %254 = vmatpush1.msra.mxu0 0.0
  %255 = vmatprep.subr.mxu0 0.0
  %256 = vmatpush1.msra.mxu0 0.0
  %257 = vmatprep.subr.mxu0 0.0
  %258 = vmatpush1.msra.mxu0 0.0
  %259 = vmatprep.subr.mxu0 0.0
  %260 = vmatpush1.msra.mxu0 %v202
  %261 = vmatprep.subr.mxu0 0.0
  %262 = vmatpush2.msra.mxu0 0.0
  %263 = vmatprep.subr.mxu0 0.0
  %264 = vmatpush2.msra.mxu0 0.0
  %265 = vmatprep.subr.mxu0 0.0
  %266 = vmatpush2.msra.mxu0 0.0
  %267 = vmatprep.subr.mxu0 0.0
  %268 = vmatpush2.msra.mxu0 0.0
  %269 = vmatprep.subr.mxu0 0.0
  %270 = vmatpush2.msra.mxu0 0.0
  %271 = vmatprep.subr.mxu0 0.0
  %272 = vmatpush2.msra.mxu0 0.0
  %273 = vmatprep.subr.mxu0 0.0
  %274 = vmatpush2.msra.mxu0 0.0
  %275 = vmatprep.subr.mxu0 0.0
  %276 = vmatpush2.msra.mxu0 0.0
  %277 = vmatprep.subr.mxu0 0.0
  %278 = vmatpush2.msra.mxu0 0.0
  %279 = vmatprep.subr.mxu0 0.0
  %280 = vmatpush2.msra.mxu0 0.0
  %281 = vmatprep.subr.mxu0 0.0
  %282 = vmatpush2.msra.mxu0 0.0
  %283 = vmatprep.subr.mxu0 0.0
  %284 = vmatpush2.msra.mxu0 0.0
  %285 = vmatprep.subr.mxu0 0.0
  %286 = vmatpush2.msra.mxu0 0.0
  %287 = vmatprep.subr.mxu0 0.0
  %288 = vmatpush2.msra.mxu0 0.0
  %289 = vmatprep.subr.mxu0 0.0
  %290 = vmatpush2.msra.mxu0 0.0
  %291 = vmatprep.subr.mxu0 0.0
  %292 = vmatpush2.msra.mxu0 0.0
  %293 = vmatprep.mubr.f32.mxu0 0.0
  %294 = vmatmul.mubr.f32.gmra.mxu0 %v227
  %v295 = vpop.f32.mrf.mxu0
  %v296 = vadd.f32 0.0, %v295
  %v297 = vpop.f32.mrf.mxu0
  %298 = vdwg.mxu0
  %v299 = vadd.f32 %v169, %v296
  %v300 = vtanh.pop %v299
  %v301 = vxor.u32 %v299, 2147483648
  %v302 = vmul.f32 %v301, 1.442695
  %v303 = vpow.pop %v302
  %v304 = vadd.f32 %v303, 1.0
  %v305 = vrcp.pop %v304
  %v306 = vmul.f32 1.0, %v305
  %v307 = vsel %vm205, %v300, %v306
  %308 = vrot.lane.b32.xlu0 %v307, 120
  %v309 = vpop.permute.xlu0 %308
  %310 = vrot.lane.b32.xlu0 %v307, 112
  %v311 = vpop.permute.xlu0 %310
  %312 = vrot.lane.b32.xlu0 %v307, 104
  %v313 = vpop.permute.xlu0 %312
  %v314 = vmul.f32 %v309, %v222
  %v315 = vmul.f32 %v307, %v311
  %v316 = vadd.f32 %v314, %v315
  %v317 = vtanh.pop %v316
  %v318 = vmul.f32 %v313, %v317
  %v320 = vsel %vm225, %v318, 0
  %322 = vmatprep.subr.mxu0 0.0
  %323 = vmatpush1.msra.mxu0 0.0
  %324 = vmatprep.subr.mxu0 0.0
  %325 = vmatpush1.msra.mxu0 0.0
  %326 = vmatprep.subr.mxu0 0.0
  %327 = vmatpush1.msra.mxu0 0.0
  %328 = vmatprep.subr.mxu0 0.0
  %329 = vmatpush1.msra.mxu0 0.0
  %330 = vmatprep.subr.mxu0 0.0
  %331 = vmatpush1.msra.mxu0 0.0
  %332 = vmatprep.subr.mxu0 0.0
  %333 = vmatpush1.msra.mxu0 0.0
  %334 = vmatprep.subr.mxu0 0.0
  %335 = vmatpush1.msra.mxu0 0.0
  %336 = vmatprep.subr.mxu0 0.0
  %337 = vmatpush1.msra.mxu0 0.0
  %338 = vmatprep.subr.mxu0 0.0
  %339 = vmatpush1.msra.mxu0 0.0
  %340 = vmatprep.subr.mxu0 0.0
  %341 = vmatpush1.msra.mxu0 0.0
  %342 = vmatprep.subr.mxu0 0.0
  %343 = vmatpush1.msra.mxu0 0.0
  %344 = vmatprep.subr.mxu0 0.0
  %345 = vmatpush1.msra.mxu0 0.0
  %346 = vmatprep.subr.mxu0 0.0
  %347 = vmatpush1.msra.mxu0 0.0
  %348 = vmatprep.subr.mxu0 0.0
  %349 = vmatpush1.msra.mxu0 0.0
  %350 = vmatprep.subr.mxu0 0.0
  %351 = vmatpush1.msra.mxu0 0.0
  %352 = vmatprep.subr.mxu0 0.0
  %353 = vmatpush1.msra.mxu0 %v202
  %354 = vmatprep.subr.mxu0 0.0
  %355 = vmatpush2.msra.mxu0 0.0
  %356 = vmatprep.subr.mxu0 0.0
  %357 = vmatpush2.msra.mxu0 0.0
  %358 = vmatprep.subr.mxu0 0.0
  %359 = vmatpush2.msra.mxu0 0.0
  %360 = vmatprep.subr.mxu0 0.0
  %361 = vmatpush2.msra.mxu0 0.0
  %362 = vmatprep.subr.mxu0 0.0
  %363 = vmatpush2.msra.mxu0 0.0
  %364 = vmatprep.subr.mxu0 0.0
  %365 = vmatpush2.msra.mxu0 0.0
  %366 = vmatprep.subr.mxu0 0.0
  %367 = vmatpush2.msra.mxu0 0.0
  %368 = vmatprep.subr.mxu0 0.0
  %369 = vmatpush2.msra.mxu0 0.0
  %370 = vmatprep.subr.mxu0 0.0
  %371 = vmatpush2.msra.mxu0 0.0
  %372 = vmatprep.subr.mxu0 0.0
  %373 = vmatpush2.msra.mxu0 0.0
  %374 = vmatprep.subr.mxu0 0.0
  %375 = vmatpush2.msra.mxu0 0.0
  %376 = vmatprep.subr.mxu0 0.0
  %377 = vmatpush2.msra.mxu0 0.0
  %378 = vmatprep.subr.mxu0 0.0
  %379 = vmatpush2.msra.mxu0 0.0
  %380 = vmatprep.subr.mxu0 0.0
  %381 = vmatpush2.msra.mxu0 0.0
  %382 = vmatprep.subr.mxu0 0.0
  %383 = vmatpush2.msra.mxu0 0.0
  %384 = vmatprep.subr.mxu0 0.0
  %385 = vmatpush2.msra.mxu0 0.0
  %386 = vmatprep.mubr.f32.mxu0 0.0
  %387 = vmatmul.mubr.f32.gmra.mxu0 %v320
  %v388 = vpop.f32.mrf.mxu0
  %v389 = vadd.f32 0.0, %v388
  %v390 = vpop.f32.mrf.mxu0
  %391 = vdwg.mxu0
  %v392 = vadd.f32 %v174, %v389
  %v393 = vtanh.pop %v392
  %v394 = vxor.u32 %v392, 2147483648
  %v395 = vmul.f32 %v394, 1.442695
  %v396 = vpow.pop %v395
  %v397 = vadd.f32 %v396, 1.0
  %v398 = vrcp.pop %v397
  %v399 = vmul.f32 1.0, %v398
  %v400 = vsel %vm205, %v393, %v399
  %401 = vrot.lane.b32.xlu0 %v400, 120
  %v402 = vpop.permute.xlu0 %401
  %403 = vrot.lane.b32.xlu0 %v400, 112
  %v404 = vpop.permute.xlu0 %403
  %405 = vrot.lane.b32.xlu0 %v400, 104
  %v406 = vpop.permute.xlu0 %405
  %v407 = vmul.f32 %v402, %v316
  %v408 = vmul.f32 %v400, %v404
  %v409 = vadd.f32 %v407, %v408
  %v410 = vtanh.pop %v409
  %v411 = vmul.f32 %v406, %v410
  %v413 = vsel %vm225, %v411, 0
  %415 = vmatprep.subr.mxu0 0.0
  %416 = vmatpush1.msra.mxu0 0.0
  %417 = vmatprep.subr.mxu0 0.0
  %418 = vmatpush1.msra.mxu0 0.0
  %419 = vmatprep.subr.mxu0 0.0
  %420 = vmatpush1.msra.mxu0 0.0
  %421 = vmatprep.subr.mxu0 0.0
  %422 = vmatpush1.msra.mxu0 0.0
  %423 = vmatprep.subr.mxu0 0.0
  %424 = vmatpush1.msra.mxu0 0.0
  %425 = vmatprep.subr.mxu0 0.0
  %426 = vmatpush1.msra.mxu0 0.0
  %427 = vmatprep.subr.mxu0 0.0
  %428 = vmatpush1.msra.mxu0 0.0
  %429 = vmatprep.subr.mxu0 0.0
  %430 = vmatpush1.msra.mxu0 0.0
  %431 = vmatprep.subr.mxu0 0.0
  %432 = vmatpush1.msra.mxu0 0.0
  %433 = vmatprep.subr.mxu0 0.0
  %434 = vmatpush1.msra.mxu0 0.0
  %435 = vmatprep.subr.mxu0 0.0
  %436 = vmatpush1.msra.mxu0 0.0
  %437 = vmatprep.subr.mxu0 0.0
  %438 = vmatpush1.msra.mxu0 0.0
  %439 = vmatprep.subr.mxu0 0.0
  %440 = vmatpush1.msra.mxu0 0.0
  %441 = vmatprep.subr.mxu0 0.0
  %442 = vmatpush1.msra.mxu0 0.0
  %443 = vmatprep.subr.mxu0 0.0
  %444 = vmatpush1.msra.mxu0 0.0
  %445 = vmatprep.subr.mxu0 0.0
  %446 = vmatpush1.msra.mxu0 %v202
  %447 = vmatprep.subr.mxu0 0.0
  %448 = vmatpush2.msra.mxu0 0.0
  %449 = vmatprep.subr.mxu0 0.0
  %450 = vmatpush2.msra.mxu0 0.0
  %451 = vmatprep.subr.mxu0 0.0
  %452 = vmatpush2.msra.mxu0 0.0
  %453 = vmatprep.subr.mxu0 0.0
  %454 = vmatpush2.msra.mxu0 0.0
  %455 = vmatprep.subr.mxu0 0.0
  %456 = vmatpush2.msra.mxu0 0.0
  %457 = vmatprep.subr.mxu0 0.0
  %458 = vmatpush2.msra.mxu0 0.0
  %459 = vmatprep.subr.mxu0 0.0
  %460 = vmatpush2.msra.mxu0 0.0
  %461 = vmatprep.subr.mxu0 0.0
  %462 = vmatpush2.msra.mxu0 0.0
  %463 = vmatprep.subr.mxu0 0.0
  %464 = vmatpush2.msra.mxu0 0.0
  %465 = vmatprep.subr.mxu0 0.0
  %466 = vmatpush2.msra.mxu0 0.0
  %467 = vmatprep.subr.mxu0 0.0
  %468 = vmatpush2.msra.mxu0 0.0
  %469 = vmatprep.subr.mxu0 0.0
  %470 = vmatpush2.msra.mxu0 0.0
  %471 = vmatprep.subr.mxu0 0.0
  %472 = vmatpush2.msra.mxu0 0.0
  %473 = vmatprep.subr.mxu0 0.0
  %474 = vmatpush2.msra.mxu0 0.0
  %475 = vmatprep.subr.mxu0 0.0
  %476 = vmatpush2.msra.mxu0 0.0
  %477 = vmatprep.subr.mxu0 0.0
  %478 = vmatpush2.msra.mxu0 0.0
  %479 = vmatprep.mubr.f32.mxu0 0.0
  %480 = vmatmul.mubr.f32.gmra.mxu0 %v413
  %v481 = vpop.f32.mrf.mxu0
  %v482 = vadd.f32 0.0, %v481
  %v483 = vpop.f32.mrf.mxu0
  %484 = vdwg.mxu0
  %v485 = vadd.f32 %v179, %v482
  %v486 = vtanh.pop %v485
  %v487 = vxor.u32 %v485, 2147483648
  %v488 = vmul.f32 %v487, 1.442695
  %v489 = vpow.pop %v488
  %v490 = vadd.f32 %v489, 1.0
  %v491 = vrcp.pop %v490
  %v492 = vmul.f32 1.0, %v491
  %v493 = vsel %vm205, %v486, %v492
  %494 = vrot.lane.b32.xlu0 %v493, 120
  %v495 = vpop.permute.xlu0 %494
  %496 = vrot.lane.b32.xlu0 %v493, 112
  %v497 = vpop.permute.xlu0 %496
  %498 = vrot.lane.b32.xlu0 %v493, 104
  %v499 = vpop.permute.xlu0 %498
  %v500 = vmul.f32 %v495, %v409
  %v501 = vmul.f32 %v493, %v497
  %v502 = vadd.f32 %v500, %v501
  %v503 = vtanh.pop %v502
  %v504 = vmul.f32 %v499, %v503
  %v506 = vsel %vm225, %v504, 0
  %508 = vmatprep.subr.mxu0 0.0
  %509 = vmatpush1.msra.mxu0 0.0
  %510 = vmatprep.subr.mxu0 0.0
  %511 = vmatpush1.msra.mxu0 0.0
  %512 = vmatprep.subr.mxu0 0.0
  %513 = vmatpush1.msra.mxu0 0.0
  %514 = vmatprep.subr.mxu0 0.0
  %515 = vmatpush1.msra.mxu0 0.0
  %516 = vmatprep.subr.mxu0 0.0
  %517 = vmatpush1.msra.mxu0 0.0
  %518 = vmatprep.subr.mxu0 0.0
  %519 = vmatpush1.msra.mxu0 0.0
  %520 = vmatprep.subr.mxu0 0.0
  %521 = vmatpush1.msra.mxu0 0.0
  %522 = vmatprep.subr.mxu0 0.0
  %523 = vmatpush1.msra.mxu0 0.0
  %524 = vmatprep.subr.mxu0 0.0
  %525 = vmatpush1.msra.mxu0 0.0
  %526 = vmatprep.subr.mxu0 0.0
  %527 = vmatpush1.msra.mxu0 0.0
  %528 = vmatprep.subr.mxu0 0.0
  %529 = vmatpush1.msra.mxu0 0.0
  %530 = vmatprep.subr.mxu0 0.0
  %531 = vmatpush1.msra.mxu0 0.0
  %532 = vmatprep.subr.mxu0 0.0
  %533 = vmatpush1.msra.mxu0 0.0
  %534 = vmatprep.subr.mxu0 0.0
  %535 = vmatpush1.msra.mxu0 0.0
  %536 = vmatprep.subr.mxu0 0.0
  %537 = vmatpush1.msra.mxu0 0.0
  %538 = vmatprep.subr.mxu0 0.0
  %539 = vmatpush1.msra.mxu0 %v202
  %540 = vmatprep.subr.mxu0 0.0
  %541 = vmatpush2.msra.mxu0 0.0
  %542 = vmatprep.subr.mxu0 0.0
  %543 = vmatpush2.msra.mxu0 0.0
  %544 = vmatprep.subr.mxu0 0.0
  %545 = vmatpush2.msra.mxu0 0.0
  %546 = vmatprep.subr.mxu0 0.0
  %547 = vmatpush2.msra.mxu0 0.0
  %548 = vmatprep.subr.mxu0 0.0
  %549 = vmatpush2.msra.mxu0 0.0
  %550 = vmatprep.subr.mxu0 0.0
  %551 = vmatpush2.msra.mxu0 0.0
  %552 = vmatprep.subr.mxu0 0.0
  %553 = vmatpush2.msra.mxu0 0.0
  %554 = vmatprep.subr.mxu0 0.0
  %555 = vmatpush2.msra.mxu0 0.0
  %556 = vmatprep.subr.mxu0 0.0
  %557 = vmatpush2.msra.mxu0 0.0
  %558 = vmatprep.subr.mxu0 0.0
  %559 = vmatpush2.msra.mxu0 0.0
  %560 = vmatprep.subr.mxu0 0.0
  %561 = vmatpush2.msra.mxu0 0.0
  %562 = vmatprep.subr.mxu0 0.0
  %563 = vmatpush2.msra.mxu0 0.0
  %564 = vmatprep.subr.mxu0 0.0
  %565 = vmatpush2.msra.mxu0 0.0
  %566 = vmatprep.subr.mxu0 0.0
  %567 = vmatpush2.msra.mxu0 0.0
  %568 = vmatprep.subr.mxu0 0.0
  %569 = vmatpush2.msra.mxu0 0.0
  %570 = vmatprep.subr.mxu0 0.0
  %571 = vmatpush2.msra.mxu0 0.0
  %572 = vmatprep.mubr.f32.mxu0 0.0
  %573 = vmatmul.mubr.f32.gmra.mxu0 %v506
  %v574 = vpop.f32.mrf.mxu0
  %v575 = vadd.f32 0.0, %v574
  %v576 = vpop.f32.mrf.mxu0
  %577 = vdwg.mxu0
  %v578 = vadd.f32 %v184, %v575
  %v579 = vtanh.pop %v578
  %v580 = vxor.u32 %v578, 2147483648
  %v581 = vmul.f32 %v580, 1.442695
  %v582 = vpow.pop %v581
  %v583 = vadd.f32 %v582, 1.0
  %v584 = vrcp.pop %v583
  %v585 = vmul.f32 1.0, %v584
  %v586 = vsel %vm205, %v579, %v585
  %587 = vrot.lane.b32.xlu0 %v586, 120
  %v588 = vpop.permute.xlu0 %587
  %589 = vrot.lane.b32.xlu0 %v586, 112
  %v590 = vpop.permute.xlu0 %589
  %591 = vrot.lane.b32.xlu0 %v586, 104
  %v592 = vpop.permute.xlu0 %591
  %v593 = vmul.f32 %v588, %v502
  %v594 = vmul.f32 %v586, %v590
  %v595 = vadd.f32 %v593, %v594
  %v596 = vtanh.pop %v595
  %v597 = vmul.f32 %v592, %v596
  %v599 = vsel %vm225, %v597, 0
  %601 = vmatprep.subr.mxu0 0.0
  %602 = vmatpush1.msra.mxu0 0.0
  %603 = vmatprep.subr.mxu0 0.0
  %604 = vmatpush1.msra.mxu0 0.0
  %605 = vmatprep.subr.mxu0 0.0
  %606 = vmatpush1.msra.mxu0 0.0
  %607 = vmatprep.subr.mxu0 0.0
  %608 = vmatpush1.msra.mxu0 0.0
  %609 = vmatprep.subr.mxu0 0.0
  %610 = vmatpush1.msra.mxu0 0.0
  %611 = vmatprep.subr.mxu0 0.0
  %612 = vmatpush1.msra.mxu0 0.0
  %613 = vmatprep.subr.mxu0 0.0
  %614 = vmatpush1.msra.mxu0 0.0
  %615 = vmatprep.subr.mxu0 0.0
  %616 = vmatpush1.msra.mxu0 0.0
  %617 = vmatprep.subr.mxu0 0.0
  %618 = vmatpush1.msra.mxu0 0.0
  %619 = vmatprep.subr.mxu0 0.0
  %620 = vmatpush1.msra.mxu0 0.0
  %621 = vmatprep.subr.mxu0 0.0
  %622 = vmatpush1.msra.mxu0 0.0
  %623 = vmatprep.subr.mxu0 0.0
  %624 = vmatpush1.msra.mxu0 0.0
  %625 = vmatprep.subr.mxu0 0.0
  %626 = vmatpush1.msra.mxu0 0.0
  %627 = vmatprep.subr.mxu0 0.0
  %628 = vmatpush1.msra.mxu0 0.0
  %629 = vmatprep.subr.mxu0 0.0
  %630 = vmatpush1.msra.mxu0 0.0
  %631 = vmatprep.subr.mxu0 0.0
  %632 = vmatpush1.msra.mxu0 %v202
  %633 = vmatprep.subr.mxu0 0.0
  %634 = vmatpush2.msra.mxu0 0.0
  %635 = vmatprep.subr.mxu0 0.0
  %636 = vmatpush2.msra.mxu0 0.0
  %637 = vmatprep.subr.mxu0 0.0
  %638 = vmatpush2.msra.mxu0 0.0
  %639 = vmatprep.subr.mxu0 0.0
  %640 = vmatpush2.msra.mxu0 0.0
  %641 = vmatprep.subr.mxu0 0.0
  %642 = vmatpush2.msra.mxu0 0.0
  %643 = vmatprep.subr.mxu0 0.0
  %644 = vmatpush2.msra.mxu0 0.0
  %645 = vmatprep.subr.mxu0 0.0
  %646 = vmatpush2.msra.mxu0 0.0
  %647 = vmatprep.subr.mxu0 0.0
  %648 = vmatpush2.msra.mxu0 0.0
  %649 = vmatprep.subr.mxu0 0.0
  %650 = vmatpush2.msra.mxu0 0.0
  %651 = vmatprep.subr.mxu0 0.0
  %652 = vmatpush2.msra.mxu0 0.0
  %653 = vmatprep.subr.mxu0 0.0
  %654 = vmatpush2.msra.mxu0 0.0
  %655 = vmatprep.subr.mxu0 0.0
  %656 = vmatpush2.msra.mxu0 0.0
  %657 = vmatprep.subr.mxu0 0.0
  %658 = vmatpush2.msra.mxu0 0.0
  %659 = vmatprep.subr.mxu0 0.0
  %660 = vmatpush2.msra.mxu0 0.0
  %661 = vmatprep.subr.mxu0 0.0
  %662 = vmatpush2.msra.mxu0 0.0
  %663 = vmatprep.subr.mxu0 0.0
  %664 = vmatpush2.msra.mxu0 0.0
  %665 = vmatprep.mubr.f32.mxu0 0.0
  %666 = vmatmul.mubr.f32.gmra.mxu0 %v599
  %v667 = vpop.f32.mrf.mxu0
  %v668 = vadd.f32 0.0, %v667
  %v669 = vpop.f32.mrf.mxu0
  %670 = vdwg.mxu0
  %v671 = vadd.f32 %v189, %v668
  %v672 = vtanh.pop %v671
  %v673 = vxor.u32 %v671, 2147483648
  %v674 = vmul.f32 %v673, 1.442695
  %v675 = vpow.pop %v674
  %v676 = vadd.f32 %v675, 1.0
  %v677 = vrcp.pop %v676
  %v678 = vmul.f32 1.0, %v677
  %v679 = vsel %vm205, %v672, %v678
  %680 = vrot.lane.b32.xlu0 %v679, 120
  %v681 = vpop.permute.xlu0 %680
  %682 = vrot.lane.b32.xlu0 %v679, 112
  %v683 = vpop.permute.xlu0 %682
  %684 = vrot.lane.b32.xlu0 %v679, 104
  %v685 = vpop.permute.xlu0 %684
  %v686 = vmul.f32 %v681, %v595
  %v687 = vmul.f32 %v679, %v683
  %v688 = vadd.f32 %v686, %v687
  %v689 = vtanh.pop %v688
  %v690 = vmul.f32 %v685, %v689
  %v692 = vsel %vm225, %v690, 0
  %694 = vmatprep.subr.mxu0 0.0
  %695 = vmatpush1.msra.mxu0 0.0
  %696 = vmatprep.subr.mxu0 0.0
  %697 = vmatpush1.msra.mxu0 0.0
  %698 = vmatprep.subr.mxu0 0.0
  %699 = vmatpush1.msra.mxu0 0.0
  %700 = vmatprep.subr.mxu0 0.0
  %701 = vmatpush1.msra.mxu0 0.0
  %702 = vmatprep.subr.mxu0 0.0
  %703 = vmatpush1.msra.mxu0 0.0
  %704 = vmatprep.subr.mxu0 0.0
  %705 = vmatpush1.msra.mxu0 0.0
  %706 = vmatprep.subr.mxu0 0.0
  %707 = vmatpush1.msra.mxu0 0.0
  %708 = vmatprep.subr.mxu0 0.0
  %709 = vmatpush1.msra.mxu0 0.0
  %710 = vmatprep.subr.mxu0 0.0
  %711 = vmatpush1.msra.mxu0 0.0
  %712 = vmatprep.subr.mxu0 0.0
  %713 = vmatpush1.msra.mxu0 0.0
  %714 = vmatprep.subr.mxu0 0.0
  %715 = vmatpush1.msra.mxu0 0.0
  %716 = vmatprep.subr.mxu0 0.0
  %717 = vmatpush1.msra.mxu0 0.0
  %718 = vmatprep.subr.mxu0 0.0
  %719 = vmatpush1.msra.mxu0 0.0
  %720 = vmatprep.subr.mxu0 0.0
  %721 = vmatpush1.msra.mxu0 0.0
  %722 = vmatprep.subr.mxu0 0.0
  %723 = vmatpush1.msra.mxu0 0.0
  %724 = vmatprep.subr.mxu0 0.0
  %725 = vmatpush1.msra.mxu0 %v202
  %726 = vmatprep.subr.mxu0 0.0
  %727 = vmatpush2.msra.mxu0 0.0
  %728 = vmatprep.subr.mxu0 0.0
  %729 = vmatpush2.msra.mxu0 0.0
  %730 = vmatprep.subr.mxu0 0.0
  %731 = vmatpush2.msra.mxu0 0.0
  %732 = vmatprep.subr.mxu0 0.0
  %733 = vmatpush2.msra.mxu0 0.0
  %734 = vmatprep.subr.mxu0 0.0
  %735 = vmatpush2.msra.mxu0 0.0
  %736 = vmatprep.subr.mxu0 0.0
  %737 = vmatpush2.msra.mxu0 0.0
  %738 = vmatprep.subr.mxu0 0.0
  %739 = vmatpush2.msra.mxu0 0.0
  %740 = vmatprep.subr.mxu0 0.0
  %741 = vmatpush2.msra.mxu0 0.0
  %742 = vmatprep.subr.mxu0 0.0
  %743 = vmatpush2.msra.mxu0 0.0
  %744 = vmatprep.subr.mxu0 0.0
  %745 = vmatpush2.msra.mxu0 0.0
  %746 = vmatprep.subr.mxu0 0.0
  %747 = vmatpush2.msra.mxu0 0.0
  %748 = vmatprep.subr.mxu0 0.0
  %749 = vmatpush2.msra.mxu0 0.0
  %750 = vmatprep.subr.mxu0 0.0
  %751 = vmatpush2.msra.mxu0 0.0
  %752 = vmatprep.subr.mxu0 0.0
  %753 = vmatpush2.msra.mxu0 0.0
  %754 = vmatprep.subr.mxu0 0.0
  %755 = vmatpush2.msra.mxu0 0.0
  %756 = vmatprep.subr.mxu0 0.0
  %757 = vmatpush2.msra.mxu0 0.0
  %758 = vmatprep.mubr.f32.mxu0 0.0
  %759 = vmatmul.mubr.f32.gmra.mxu0 %v692
  %v760 = vpop.f32.mrf.mxu0
  %v761 = vadd.f32 0.0, %v760
  %v762 = vpop.f32.mrf.mxu0
  %763 = vdwg.mxu0
  %v764 = vadd.f32 %v194, %v761
  %v765 = vtanh.pop %v764
  %v766 = vxor.u32 %v764, 2147483648
  %v767 = vmul.f32 %v766, 1.442695
  %v768 = vpow.pop %v767
  %v769 = vadd.f32 %v768, 1.0
  %v770 = vrcp.pop %v769
  %v771 = vmul.f32 1.0, %v770
  %v772 = vsel %vm205, %v765, %v771
  %773 = vrot.lane.b32.xlu0 %v772, 120
  %v774 = vpop.permute.xlu0 %773
  %775 = vrot.lane.b32.xlu0 %v772, 112
  %v776 = vpop.permute.xlu0 %775
  %777 = vrot.lane.b32.xlu0 %v772, 104
  %v778 = vpop.permute.xlu0 %777
  %v779 = vmul.f32 %v774, %v688
  %v780 = vmul.f32 %v772, %v776
  %v781 = vadd.f32 %v779, %v780
  %v782 = vtanh.pop %v781
  %v783 = vmul.f32 %v778, %v782
  %v785 = vsel %vm225, %v783, 0
  %787 = vmatprep.subr.mxu0 0.0
  %788 = vmatpush1.msra.mxu0 0.0
  %789 = vmatprep.subr.mxu0 0.0
  %790 = vmatpush1.msra.mxu0 0.0
  %791 = vmatprep.subr.mxu0 0.0
  %792 = vmatpush1.msra.mxu0 0.0
  %793 = vmatprep.subr.mxu0 0.0
  %794 = vmatpush1.msra.mxu0 0.0
  %795 = vmatprep.subr.mxu0 0.0
  %796 = vmatpush1.msra.mxu0 0.0
  %797 = vmatprep.subr.mxu0 0.0
  %798 = vmatpush1.msra.mxu0 0.0
  %799 = vmatprep.subr.mxu0 0.0
  %800 = vmatpush1.msra.mxu0 0.0
  %801 = vmatprep.subr.mxu0 0.0
  %802 = vmatpush1.msra.mxu0 0.0
  %803 = vmatprep.subr.mxu0 0.0
  %804 = vmatpush1.msra.mxu0 0.0
  %805 = vmatprep.subr.mxu0 0.0
  %806 = vmatpush1.msra.mxu0 0.0
  %807 = vmatprep.subr.mxu0 0.0
  %808 = vmatpush1.msra.mxu0 0.0
  %809 = vmatprep.subr.mxu0 0.0
  %810 = vmatpush1.msra.mxu0 0.0
  %811 = vmatprep.subr.mxu0 0.0
  %812 = vmatpush1.msra.mxu0 0.0
  %813 = vmatprep.subr.mxu0 0.0
  %814 = vmatpush1.msra.mxu0 0.0
  %815 = vmatprep.subr.mxu0 0.0
  %816 = vmatpush1.msra.mxu0 0.0
  %817 = vmatprep.subr.mxu0 0.0
  %818 = vmatpush1.msra.mxu0 %v202
  %819 = vmatprep.subr.mxu0 0.0
  %820 = vmatpush2.msra.mxu0 0.0
  %821 = vmatprep.subr.mxu0 0.0
  %822 = vmatpush2.msra.mxu0 0.0
  %823 = vmatprep.subr.mxu0 0.0
  %824 = vmatpush2.msra.mxu0 0.0
  %825 = vmatprep.subr.mxu0 0.0
  %826 = vmatpush2.msra.mxu0 0.0
  %827 = vmatprep.subr.mxu0 0.0
  %828 = vmatpush2.msra.mxu0 0.0
  %829 = vmatprep.subr.mxu0 0.0
  %830 = vmatpush2.msra.mxu0 0.0
  %831 = vmatprep.subr.mxu0 0.0
  %832 = vmatpush2.msra.mxu0 0.0
  %833 = vmatprep.subr.mxu0 0.0
  %834 = vmatpush2.msra.mxu0 0.0
  %835 = vmatprep.subr.mxu0 0.0
  %836 = vmatpush2.msra.mxu0 0.0
  %837 = vmatprep.subr.mxu0 0.0
  %838 = vmatpush2.msra.mxu0 0.0
  %839 = vmatprep.subr.mxu0 0.0
  %840 = vmatpush2.msra.mxu0 0.0
  %841 = vmatprep.subr.mxu0 0.0
  %842 = vmatpush2.msra.mxu0 0.0
  %843 = vmatprep.subr.mxu0 0.0
  %844 = vmatpush2.msra.mxu0 0.0
  %845 = vmatprep.subr.mxu0 0.0
  %846 = vmatpush2.msra.mxu0 0.0
  %847 = vmatprep.subr.mxu0 0.0
  %848 = vmatpush2.msra.mxu0 0.0
  %849 = vmatprep.subr.mxu0 0.0
  %850 = vmatpush2.msra.mxu0 0.0
  %851 = vmatprep.mubr.f32.mxu0 0.0
  %852 = vmatmul.mubr.f32.gmra.mxu0 %v785
  %v853 = vpop.f32.mrf.mxu0
  %v854 = vadd.f32 0.0, %v853
  %v855 = vpop.f32.mrf.mxu0
  %856 = vdwg.mxu0
  %v857 = vadd.f32 %v199, %v854
  %v858 = vtanh.pop %v857
  %v859 = vxor.u32 %v857, 2147483648
  %v860 = vmul.f32 %v859, 1.442695
  %v861 = vpow.pop %v860
  %v862 = vadd.f32 %v861, 1.0
  %v863 = vrcp.pop %v862
  %v864 = vmul.f32 1.0, %v863
  %v865 = vsel %vm205, %v858, %v864
  %866 = vrot.lane.b32.xlu0 %v865, 120
  %v867 = vpop.permute.xlu0 %866
  %868 = vrot.lane.b32.xlu0 %v865, 112
  %v869 = vpop.permute.xlu0 %868
  %870 = vrot.lane.b32.xlu0 %v865, 104
  %v871 = vpop.permute.xlu0 %870
  %v872 = vmul.f32 %v867, %v781
  %v873 = vmul.f32 %v865, %v869
  %v874 = vadd.f32 %v872, %v873
  %v875 = vtanh.pop %v874
  %v876 = vmul.f32 %v871, %v875
  %v877 = vld [vmem:[%s3] sm:$0xff]
  %v878 = vld [vmem:[%s4] sm:$0x1]
  %v880 = vlaneseq
  %v881 = vshrl.u32 %v880, 7
  %v882 = vsub.s32 0, %v881
  %v883 = vrot.slane %v878, %v882
  %v886 = vsel %vm225, %v876, 0
  %888 = vmatprep.subr.mxu0 0.0
  %889 = vmatpush1.msra.mxu0 0.0
  %890 = vmatprep.subr.mxu0 0.0
  %891 = vmatpush1.msra.mxu0 0.0
  %892 = vmatprep.subr.mxu0 0.0
  %893 = vmatpush1.msra.mxu0 0.0
  %894 = vmatprep.subr.mxu0 0.0
  %895 = vmatpush1.msra.mxu0 0.0
  %896 = vmatprep.subr.mxu0 0.0
  %897 = vmatpush1.msra.mxu0 0.0
  %898 = vmatprep.subr.mxu0 0.0
  %899 = vmatpush1.msra.mxu0 0.0
  %900 = vmatprep.subr.mxu0 0.0
  %901 = vmatpush1.msra.mxu0 0.0
  %902 = vmatprep.subr.mxu0 0.0
  %903 = vmatpush1.msra.mxu0 0.0
  %904 = vmatprep.subr.mxu0 0.0
  %905 = vmatpush1.msra.mxu0 0.0
  %906 = vmatprep.subr.mxu0 0.0
  %907 = vmatpush1.msra.mxu0 0.0
  %908 = vmatprep.subr.mxu0 0.0
  %909 = vmatpush1.msra.mxu0 0.0
  %910 = vmatprep.subr.mxu0 0.0
  %911 = vmatpush1.msra.mxu0 0.0
  %912 = vmatprep.subr.mxu0 0.0
  %913 = vmatpush1.msra.mxu0 0.0
  %914 = vmatprep.subr.mxu0 0.0
  %915 = vmatpush1.msra.mxu0 0.0
  %916 = vmatprep.subr.mxu0 0.0
  %917 = vmatpush1.msra.mxu0 0.0
  %918 = vmatprep.subr.mxu0 0.0
  %919 = vmatpush1.msra.mxu0 %v877
  %920 = vmatprep.subr.mxu0 0.0
  %921 = vmatpush2.msra.mxu0 0.0
  %922 = vmatprep.subr.mxu0 0.0
  %923 = vmatpush2.msra.mxu0 0.0
  %924 = vmatprep.subr.mxu0 0.0
  %925 = vmatpush2.msra.mxu0 0.0
  %926 = vmatprep.subr.mxu0 0.0
  %927 = vmatpush2.msra.mxu0 0.0
  %928 = vmatprep.subr.mxu0 0.0
  %929 = vmatpush2.msra.mxu0 0.0
  %930 = vmatprep.subr.mxu0 0.0
  %931 = vmatpush2.msra.mxu0 0.0
  %932 = vmatprep.subr.mxu0 0.0
  %933 = vmatpush2.msra.mxu0 0.0
  %934 = vmatprep.subr.mxu0 0.0
  %935 = vmatpush2.msra.mxu0 0.0
  %936 = vmatprep.subr.mxu0 0.0
  %937 = vmatpush2.msra.mxu0 0.0
  %938 = vmatprep.subr.mxu0 0.0
  %939 = vmatpush2.msra.mxu0 0.0
  %940 = vmatprep.subr.mxu0 0.0
  %941 = vmatpush2.msra.mxu0 0.0
  %942 = vmatprep.subr.mxu0 0.0
  %943 = vmatpush2.msra.mxu0 0.0
  %944 = vmatprep.subr.mxu0 0.0
  %945 = vmatpush2.msra.mxu0 0.0
  %946 = vmatprep.subr.mxu0 0.0
  %947 = vmatpush2.msra.mxu0 0.0
  %948 = vmatprep.subr.mxu0 0.0
  %949 = vmatpush2.msra.mxu0 0.0
  %950 = vmatprep.subr.mxu0 0.0
  %951 = vmatpush2.msra.mxu0 0.0
  %952 = vmatprep.mubr.f32.mxu0 0.0
  %953 = vmatmul.mubr.f32.gmra.mxu0 %v886
  %v954 = vpop.f32.mrf.mxu0
  %v955 = vadd.f32 %v883, %v954
  %v956 = vpop.f32.mrf.mxu0
  %957 = vdwg.mxu0
  %958 = vst [vmem:[%s5] sm:$0xff] %v955
  // Predicated region
  $region22: #{forward.1} parent=0 // pred_check
    _
  $region23: #{forward.1} parent=0 // pred_check_branch
    %960 = sbr.rel (0) target = $region25
  $region24: #{forward.1} parent=0 // pred_region
    _
  $region25: #{forward.1} parent=0 // pred_fallthru
    _
  // Predicated region
  $region26: #{forward.1} parent=0 // pred_check
    _
  $region27: #{forward.1} parent=0 // pred_check_branch
    %962 = sbr.rel (0) target = $region29
  $region28: #{forward.1} parent=0 // pred_region
    _
  $region29: #{forward.1} parent=0 // pred_fallthru
    _

</llo_original>
